<compile_context>
chip_gen: v6e
topology: v6e:2x2x1
jax: 0.10.0
libtpu: 0.0.40
codegen_flags: <defaults>
</compile_context>

<pallas_src>
import jax
import jax.numpy as jnp
from jax.experimental import pallas as pl
from jax.experimental.pallas import tpu as pltpu


def _channel_attention_kernel(x_ref, w1_ref, w2_ref, o_ref):
    x = x_ref[...]                                   # (NB, C, HW), native dtype
    hw = x.shape[-1]

    # AdaptiveAvgPool2d(1): f32 accumulation without an f32 copy of the block.
    avg = jnp.sum(x, axis=2, dtype=jnp.float32) * (1.0 / float(hw))   # (NB, C)
    # AdaptiveMaxPool2d(1): reduce in native dtype (block holds true HW extent,
    # so no masking is needed).
    mx = jnp.max(x, axis=2).astype(jnp.float32)                       # (NB, C)

    w1 = w1_ref[...].astype(jnp.float32)             # (hidden, C)
    w2 = w2_ref[...].astype(jnp.float32)             # (C, hidden)

    def mlp(p):                                      # p: (NB, C) f32
        h = jnp.einsum('nc,hc->nh', p, w1,
                       preferred_element_type=jnp.float32)            # fc1
        h = jnp.maximum(h, 0.0)                                        # ReLU
        return jnp.einsum('nh,ch->nc', h, w2,
                          preferred_element_type=jnp.float32)          # fc2

    # sigmoid(avg_path + max_path); per-channel scale broadcast over spatial.
    scale = jax.nn.sigmoid(mlp(avg) + mlp(mx))       # (NB, C) f32
    # Multiply in the input dtype so bf16 inputs never get an f32 block copy.
    o_ref[...] = (x * scale.astype(x.dtype)[:, :, None]).astype(o_ref.dtype)


def channel_attention(x, w1, w2):
    """x: (N, C, H, W); w1: (C//ratio, C); w2: (C, C//ratio)."""
    N, C, H, W = x.shape
    HW = H * W
    hidden = w1.shape[0]

    # Free reshape (contiguous) — no extra HBM traffic, no padding.
    x2 = x.reshape(N, C, HW)

    # --- generation-aware VMEM budgeting ---
    try:
        vmem_cap = int(pltpu.get_tpu_info().vmem_capacity_bytes)
    except Exception:
        vmem_cap = 64 << 20           # conservative: v7x per-TensorCore VMEM
    vmem_budget = (vmem_cap * 3) // 4  # leave headroom for Mosaic internals

    per_n_bytes = C * HW * x2.dtype.itemsize
    w_bytes = w1.size * w1.dtype.itemsize + w2.size * w2.dtype.itemsize
    headroom = 2 << 20
    # in + out blocks, each double-buffered => 4x block, plus 2x weights.
    block_budget = max(per_n_bytes,
                       (vmem_budget - 2 * w_bytes - headroom) // 4)
    nb_cap = max(1, block_budget // per_n_bytes)
    # TODO(synk): if a single (C, HW) image exceeds the v7x budget, split HW
    # over a second "arbitrary" grid axis with scratch sum/max accumulators.

    # Batch nb images per grid step; prefer an even grid length >= 2 so v7x's
    # two TensorCores split the grid evenly (harmless on 1-TC parts: the block
    # shrinks at most 2x and the kernel stays HBM-bound).
    candidates = [d for d in range(1, N + 1) if N % d == 0 and d <= nb_cap]
    even_grid = [d for d in candidates if (N // d) >= 2 and (N // d) % 2 == 0]
    nb = max(even_grid) if even_grid else max(candidates)
    grid = (N // nb,)

    block_bytes = nb * per_n_bytes
    vmem_needed = 4 * block_bytes + 2 * w_bytes + headroom
    vmem_limit = int(min(max(vmem_needed, 16 << 20), vmem_cap))

    out = pl.pallas_call(
        _channel_attention_kernel,
        out_shape=jax.ShapeDtypeStruct((N, C, HW), x.dtype),
        grid_spec=pltpu.PrefetchScalarGridSpec(
            num_scalar_prefetch=0,
            grid=grid,
            in_specs=[
                # Trailing block dims equal the full array dims (C, HW), so the
                # (8,128) divisibility constraint does not apply.
                pl.BlockSpec((nb, C, HW), lambda b: (b, 0, 0)),
                pl.BlockSpec((hidden, C), lambda b: (0, 0)),
                pl.BlockSpec((C, hidden), lambda b: (0, 0)),
            ],
            out_specs=pl.BlockSpec((nb, C, HW), lambda b: (b, 0, 0)),
        ),
        compiler_params=pltpu.CompilerParams(
            dimension_semantics=("parallel",),
            vmem_limit_bytes=vmem_limit,
        ),
    )(x2, w1, w2)

    return out.reshape(N, C, H, W)


def channel_attention_ref(x, w1, w2):
    """Pure-JAX reference mirroring the PyTorch forward."""
    avg = jnp.mean(x, axis=(2, 3), keepdims=True)    # (N,C,1,1)
    mx = jnp.max(x, axis=(2, 3), keepdims=True)      # (N,C,1,1)

    def mlp(p):                                      # p: (N,C,1,1)
        v = p[:, :, 0, 0]                            # (N,C)
        h = jnp.maximum(v @ w1.T, 0.0)               # (N,hidden)
        o = h @ w2.T                                 # (N,C)
        return o[:, :, None, None]

    scale = jax.nn.sigmoid(mlp(avg) + mlp(mx))
    return scale * x


if __name__ == "__main__":
    key = jax.random.PRNGKey(0)
    k_x, k_w1, k_w2 = jax.random.split(key, 3)

    N, C, H, W = 2, 64, 16, 16
    ratio = 16
    hidden = C // ratio  # 4

    x = jax.random.normal(k_x, (N, C, H, W), dtype=jnp.float32)
    # Deterministic synthetic 1x1-conv weights (trailing 1x1 squeezed).
    w1 = jax.random.normal(k_w1, (hidden, C), dtype=jnp.float32) * (1.0 / jnp.sqrt(C))
    w2 = jax.random.normal(k_w2, (C, hidden), dtype=jnp.float32) * (1.0 / jnp.sqrt(hidden))

    out = jax.block_until_ready(channel_attention(x, w1, w2))
    ref = channel_attention_ref(x, w1, w2)
    assert out.shape == (N, C, H, W)
    assert jnp.allclose(out, ref, atol=1e-5, rtol=1e-5), "mismatch vs reference"

    # Exercise a spatial size that is NOT a multiple of 128 (no padding path).
    Hp, Wp = 7, 7
    xp = jax.random.normal(k_x, (4, C, Hp, Wp), dtype=jnp.float32)
    outp = jax.block_until_ready(channel_attention(xp, w1, w2))
    refp = channel_attention_ref(xp, w1, w2)
    assert jnp.allclose(outp, refp, atol=1e-5, rtol=1e-5), "mismatch (HW=49)"

    # Exercise the low-precision path (no whole-block f32 materialization).
    xb = x.astype(jnp.bfloat16)
    w1b = w1.astype(jnp.bfloat16)
    w2b = w2.astype(jnp.bfloat16)
    outb = jax.block_until_ready(channel_attention(xb, w1b, w2b))
    refb = channel_attention_ref(xb.astype(jnp.float32),
                                 w1b.astype(jnp.float32),
                                 w2b.astype(jnp.float32))
    assert outb.dtype == jnp.bfloat16
    assert jnp.allclose(outb.astype(jnp.float32), refb, atol=5e-2, rtol=5e-2), \
        "mismatch (bf16)"

    print("KERNEL_OK")
</pallas_src>

<mosaic_0001>
module attributes {stable_mosaic.version = 11 : i64} {
  func.func @_channel_attention_kernel(%arg0: i32, %arg1: memref<1x64x256xf32, #tpu.memory_space<vmem>>, %arg2: memref<4x64xf32, #tpu.memory_space<vmem>>, %arg3: memref<64x4xf32, #tpu.memory_space<vmem>>, %arg4: memref<1x64x256xf32, #tpu.memory_space<vmem>>) attributes {dimension_semantics = [#tpu.dimension_semantics<parallel>], iteration_bounds = array<i64: 2>, scalar_prefetch = 0 : i64, scratch_operands = 0 : i64, tpu.core_type = #tpu.core_type<tc>, window_params = [{transform_indices = @transform_0, window_bounds = array<i64: 1, 64, 256>}, {pipeline_mode = #tpu.pipeline_mode<synchronous>, transform_indices = @transform_1, window_bounds = array<i64: 4, 64>}, {pipeline_mode = #tpu.pipeline_mode<synchronous>, transform_indices = @transform_2, window_bounds = array<i64: 64, 4>}, {transform_indices = @transform_3, window_bounds = array<i64: 1, 64, 256>}]} {
    %c0 = arith.constant 0 : index
    %c0_0 = arith.constant 0 : index
    %c0_1 = arith.constant 0 : index
    %0 = vector.load %arg1[%c0, %c0_0, %c0_1] : memref<1x64x256xf32, #tpu.memory_space<vmem>>, vector<1x64x256xf32>
    %cst = arith.constant dense<0.000000e+00> : vector<1x64xf32>
    %1 = vector.multi_reduction <add>, %0, %cst [2] : vector<1x64x256xf32> to vector<1x64xf32>
    %cst_2 = arith.constant 3.906250e-03 : f32
    %2 = vector.broadcast %cst_2 : f32 to vector<1x64xf32>
    %3 = arith.mulf %1, %2 : vector<1x64xf32>
    %cst_3 = arith.constant dense<0xFF800000> : vector<1x64xf32>
    %4 = vector.multi_reduction <maximumf>, %0, %cst_3 [2] : vector<1x64x256xf32> to vector<1x64xf32>
    %c0_4 = arith.constant 0 : index
    %c0_5 = arith.constant 0 : index
    %5 = vector.load %arg2[%c0_4, %c0_5] : memref<4x64xf32, #tpu.memory_space<vmem>>, vector<4x64xf32>
    %c0_6 = arith.constant 0 : index
    %c0_7 = arith.constant 0 : index
    %6 = vector.load %arg3[%c0_6, %c0_7] : memref<64x4xf32, #tpu.memory_space<vmem>>, vector<64x4xf32>
    "tpu.trace_start"() <{level = 10 : i32, message = "nc,hc->nh"}> : () -> ()
    %cst_8 = arith.constant dense<0.000000e+00> : vector<1x4xf32>
    %7 = tpu.matmul %3, %5, %cst_8 {dimension_numbers = #tpu.dot_dimension_numbers<[1], [1], [0], [0], [0, 0, 1, 0], [], []>} : vector<1x64xf32>, vector<4x64xf32>, vector<1x4xf32> -> vector<1x4xf32>
    "tpu.trace_stop"() : () -> ()
    %cst_9 = arith.constant 0.000000e+00 : f32
    %8 = vector.broadcast %cst_9 : f32 to vector<1x4xf32>
    %9 = arith.maximumf %7, %8 : vector<1x4xf32>
    "tpu.trace_start"() <{level = 10 : i32, message = "nh,ch->nc"}> : () -> ()
    %cst_10 = arith.constant dense<0.000000e+00> : vector<1x64xf32>
    %10 = tpu.matmul %9, %6, %cst_10 {dimension_numbers = #tpu.dot_dimension_numbers<[1], [1], [0], [0], [0, 0, 1, 0], [], []>} : vector<1x4xf32>, vector<64x4xf32>, vector<1x64xf32> -> vector<1x64xf32>
    "tpu.trace_stop"() : () -> ()
    "tpu.trace_start"() <{level = 10 : i32, message = "nc,hc->nh"}> : () -> ()
    %cst_11 = arith.constant dense<0.000000e+00> : vector<1x4xf32>
    %11 = tpu.matmul %4, %5, %cst_11 {dimension_numbers = #tpu.dot_dimension_numbers<[1], [1], [0], [0], [0, 0, 1, 0], [], []>} : vector<1x64xf32>, vector<4x64xf32>, vector<1x4xf32> -> vector<1x4xf32>
    "tpu.trace_stop"() : () -> ()
    %cst_12 = arith.constant 0.000000e+00 : f32
    %12 = vector.broadcast %cst_12 : f32 to vector<1x4xf32>
    %13 = arith.maximumf %11, %12 : vector<1x4xf32>
    "tpu.trace_start"() <{level = 10 : i32, message = "nh,ch->nc"}> : () -> ()
    %cst_13 = arith.constant dense<0.000000e+00> : vector<1x64xf32>
    %14 = tpu.matmul %13, %6, %cst_13 {dimension_numbers = #tpu.dot_dimension_numbers<[1], [1], [0], [0], [0, 0, 1, 0], [], []>} : vector<1x4xf32>, vector<64x4xf32>, vector<1x64xf32> -> vector<1x64xf32>
    "tpu.trace_stop"() : () -> ()
    %15 = arith.addf %10, %14 : vector<1x64xf32>
    %16 = arith.negf %15 : vector<1x64xf32>
    %17 = math.exp %16 : vector<1x64xf32>
    %cst_14 = arith.constant 1.000000e+00 : f32
    %18 = vector.broadcast %cst_14 : f32 to vector<1x64xf32>
    %19 = arith.addf %18, %17 : vector<1x64xf32>
    %20 = arith.divf %18, %19 : vector<1x64xf32>
    %21 = vector.shape_cast %20 : vector<1x64xf32> to vector<1x64x1xf32>
    %22 = vector.broadcast %21 : vector<1x64x1xf32> to vector<1x64x256xf32>
    %23 = arith.mulf %0, %22 : vector<1x64x256xf32>
    %c0_15 = arith.constant 0 : index
    %c0_16 = arith.constant 0 : index
    %c0_17 = arith.constant 0 : index
    %24 = vector.load %arg4[%c0_15, %c0_16, %c0_17] : memref<1x64x256xf32, #tpu.memory_space<vmem>>, vector<1x64x256xf32>
    tpu.vector_store %arg4[%c0_15, %c0_16, %c0_17], %23 {strides = array<i32>} : memref<1x64x256xf32, #tpu.memory_space<vmem>>, vector<1x64x256xf32>,
    return
  }
  func.func @transform_0(%arg0: i32) -> (i32, i32, i32) {
    %c0_i32 = arith.constant 0 : i32
    %c0_i32_0 = arith.constant 0 : i32
    %c0_i32_1 = arith.constant 0 : i32
    return %arg0, %c0_i32, %c0_i32_0 : i32, i32, i32
  }
  func.func @transform_1(%arg0: i32) -> (i32, i32) {
    %c0_i32 = arith.constant 0 : i32
    %c0_i32_0 = arith.constant 0 : i32
    %c0_i32_1 = arith.constant 0 : i32
    return %c0_i32, %c0_i32_0 : i32, i32
  }
  func.func @transform_2(%arg0: i32) -> (i32, i32) {
    %c0_i32 = arith.constant 0 : i32
    %c0_i32_0 = arith.constant 0 : i32
    %c0_i32_1 = arith.constant 0 : i32
    return %c0_i32, %c0_i32_0 : i32, i32
  }
  func.func @transform_3(%arg0: i32) -> (i32, i32, i32) {
    %c0_i32 = arith.constant 0 : i32
    %c0_i32_0 = arith.constant 0 : i32
    %c0_i32_1 = arith.constant 0 : i32
    return %arg0, %c0_i32, %c0_i32_0 : i32, i32, i32
  }
}

</mosaic_0001>

<llo_original>
// kernel: tpu_custom_call.1
$region0: #{tpu_custom_call.1}
  #allocation0 [shape = 'u32[]', space=smem, size = 0x4, offset = 0x4, fixed_abs, tag = 'smem constant byte address 0x4 - core index']
  #allocation1 [shape = 'u32[144,128]{1,0:T(1,128)}', space=vmem, size = 0x12000, scoped, tag = 'internal scratch']
  %s0 = inlined_call_operand.hbm [shape: f32[2,64,256], index: 0, kind: input, shape index: {}]
  %s1 = inlined_call_operand.vmem [shape: f32[4,64], index: 1, kind: input, shape index: {}]
  %s2 = inlined_call_operand.vmem [shape: f32[64,4], index: 2, kind: input, shape index: {}]
  %s3 = inlined_call_operand.hbm [shape: f32[2,64,256], index: 3, kind: output, shape index: {}]
  %s4 = sld [smem:[#allocation0]]
  $region49: #{tpu_custom_call.1} parent=0
    _
  %s6 = ssub.s32 1, %s4
  %s7 = scalar_select 0, %s6, %s4
  $region1: #{tpu_custom_call.1} parent=0
    #allocation2 [shape = 'u8[131072]{0}', space=vmem, size = 0x20000, scoped, tag = 'input window, operand 0']
    #allocation3 [shape = 's32[2]{0}', space=sflag, size = 0x8, scoped, tag = 'scoped memory for tpu_custom_call.1']
    #allocation4 [shape = 's32[2]{0}', space=sflag, size = 0x8, scoped, tag = 'scoped memory for tpu_custom_call.1']
    #allocation5 [shape = 'u8[131072]{0}', space=vmem, size = 0x20000, scoped, tag = 'output window, operand 0']
    %8 = vsyncpa [#allocation3], 0
    %s9 = scalar_lea.sflag [#allocation3], 1
    %10 = vsyncpa %s9, 0
    %11 = vsyncpa [#allocation4], 0
    %s12 = scalar_lea.sflag [#allocation4], 1
    %13 = vsyncpa %s12, 0
    loop: start=0, step=1, limit=4
    $region2: #{tpu_custom_call.1} parent=1 // loop_pre_header
      _
    $region3: #{tpu_custom_call.1} parent=1 // loop_header
      %s15 = sphi 0, %s19
      %p16 = scmp.ge.s32.totalorder %s15, 4
      %s25 = sphi 0, %s27
      %s28 = sphi 0, %s25
      %s29 = sphi 0, %s28
      %s45 = sphi 0, %s29
      %s49 = sphi 0, %s49
      %s51 = sphi 0, %s49
      %s52 = sphi 0, %s51
      %s66 = sphi 0, %s52
      %s70 = sphi 0, %s70
      %s72 = sphi 0, %s70
      %s73 = sphi 0, %s72
      %s87 = sphi 0, %s73
      %s93 = sphi 0, %s95
      %s96 = sphi 0, %s93
      %s97 = sphi 0, %s96
      %s113 = sphi 0, %s97
    $region4: #{tpu_custom_call.1} parent=1 // loop_header_branch
      %18 = sbr.rel (%p16) target = $region8
    $region5: #{tpu_custom_call.1} parent=1 // loop_body
      %s20 = ssub.s32 %s15, 1
      %s21 = ssub.s32 %s15, 2
      %s22 = sadd.s32 %s15, 1
      %s23 = ssub.s32 %s15, %s22
      %p24 = scmp.eq.s32.totalorder %s23, 0
      %s26 = sadd.s32 %s25, 1
      %s27 = scalar_select %p24, %s25, %s26
      %p30 = pneg %p24
      %p31 = scmp.eq.s32.totalorder %s15, 1
      %p32 = por %p30, %p31
      %p33 = scmp.ne.s32.totalorder %s25, %s28
      %p34 = scmp.eq.s32.totalorder %s15, 0
      %p35 = por %p33, %p34
      %p36 = scmp.ne.s32.totalorder %s25, %s28
      %p37 = scmp.eq.s32.totalorder %s20, 1
      %p38 = por %p36, %p37
      %p39 = scmp.ne.s32.totalorder %s28, %s29
      %p40 = scmp.eq.s32.totalorder %s20, 0
      %p41 = por %p39, %p40
      %p42 = scmp.ne.s32.totalorder %s28, %s29
      %p43 = scmp.eq.s32.totalorder %s21, 1
      %p44 = por %p42, %p43
      %p46 = scmp.ne.s32.totalorder %s29, %s45
      %p47 = scmp.eq.s32.totalorder %s21, 0
      %p48 = por %p46, %p47
      %s50 = sadd.s32 %s49, 1
      %p53 = scmp.eq.s32.totalorder %s15, 1
      %p54 = scmp.ne.s32.totalorder %s49, %s51
      %p55 = scmp.eq.s32.totalorder %s15, 0
      %p56 = por %p54, %p55
      %p57 = scmp.ne.s32.totalorder %s49, %s51
      %p58 = scmp.eq.s32.totalorder %s20, 1
      %p59 = por %p57, %p58
      %p60 = scmp.ne.s32.totalorder %s51, %s52
      %p61 = scmp.eq.s32.totalorder %s20, 0
      %p62 = por %p60, %p61
      %p63 = scmp.ne.s32.totalorder %s51, %s52
      %p64 = scmp.eq.s32.totalorder %s21, 1
      %p65 = por %p63, %p64
      %p67 = scmp.ne.s32.totalorder %s52, %s66
      %p68 = scmp.eq.s32.totalorder %s21, 0
      %p69 = por %p67, %p68
      %s71 = sadd.s32 %s70, 1
      %p74 = scmp.eq.s32.totalorder %s15, 1
      %p75 = scmp.ne.s32.totalorder %s70, %s72
      %p76 = scmp.eq.s32.totalorder %s15, 0
      %p77 = por %p75, %p76
      %p78 = scmp.ne.s32.totalorder %s70, %s72
      %p79 = scmp.eq.s32.totalorder %s20, 1
      %p80 = por %p78, %p79
      %p81 = scmp.ne.s32.totalorder %s72, %s73
      %p82 = scmp.eq.s32.totalorder %s20, 0
      %p83 = por %p81, %p82
      %p84 = scmp.ne.s32.totalorder %s72, %s73
      %p85 = scmp.eq.s32.totalorder %s21, 1
      %p86 = por %p84, %p85
      %p88 = scmp.ne.s32.totalorder %s73, %s87
      %p89 = scmp.eq.s32.totalorder %s21, 0
      %p90 = por %p88, %p89
      %s91 = ssub.s32 %s15, %s22
      %p92 = scmp.eq.s32.totalorder %s91, 0
      %s94 = sadd.s32 %s93, 1
      %s95 = scalar_select %p92, %s93, %s94
      %p98 = pneg %p92
      %p99 = scmp.eq.s32.totalorder %s15, 1
      %p100 = por %p98, %p99
      %p101 = scmp.ne.s32.totalorder %s93, %s96
      %p102 = scmp.eq.s32.totalorder %s15, 0
      %p103 = por %p101, %p102
      %p104 = scmp.ne.s32.totalorder %s93, %s96
      %p105 = scmp.eq.s32.totalorder %s20, 1
      %p106 = por %p104, %p105
      %p107 = scmp.ne.s32.totalorder %s96, %s97
      %p108 = scmp.eq.s32.totalorder %s20, 0
      %p109 = por %p107, %p108
      %p110 = scmp.ne.s32.totalorder %s96, %s97
      %p111 = scmp.eq.s32.totalorder %s21, 1
      %p112 = por %p110, %p111
      %p114 = scmp.ne.s32.totalorder %s97, %s113
      %p115 = scmp.eq.s32.totalorder %s21, 0
      %p116 = por %p114, %p115
      %p117 = scmp.le.s32.totalorder 1, %s15
      %p118 = scmp.lt.s32.totalorder %s15, 3
      %p119 = pnand %p117, %p118
      %p120 = pneg %p119
      // Predicated region
      $region9: #{tpu_custom_call.1} parent=5 // pred_check
        _
      $region10: #{tpu_custom_call.1} parent=5 // pred_check_branch
        %122 = sbr.rel (%p119) target = $region12
      $region11: #{tpu_custom_call.1} parent=5 // pred_region
        %s123 = ssub.s32 %s15, 1
        // Predicated region
        $region13: #{tpu_custom_call.1} parent=11 // pred_check
          %p124 = pneg %p62
        $region14: #{tpu_custom_call.1} parent=11 // pred_check_branch
          %126 = sbr.rel (%p124) target = $region16
        $region15: #{tpu_custom_call.1} parent=11 // pred_region
          _
        $region16: #{tpu_custom_call.1} parent=11 // pred_fallthru
          _
        // Predicated region
        $region17: #{tpu_custom_call.1} parent=11 // pred_check
          %p127 = pneg %p83
        $region18: #{tpu_custom_call.1} parent=11 // pred_check_branch
          %129 = sbr.rel (%p127) target = $region20
        $region19: #{tpu_custom_call.1} parent=11 // pred_region
          _
        $region20: #{tpu_custom_call.1} parent=11 // pred_fallthru
          _
      $region12: #{tpu_custom_call.1} parent=5 // pred_fallthru
        _
      %p130 = scmp.lt.s32.totalorder %s15, 2
      // Predicated region
      $region21: #{tpu_custom_call.1} parent=5 // pred_check
        %p131 = pneg %p130
      $region22: #{tpu_custom_call.1} parent=5 // pred_check_branch
        %133 = sbr.rel (%p131) target = $region24
      $region23: #{tpu_custom_call.1} parent=5 // pred_region
        // Predicated region
        $region25: #{tpu_custom_call.1} parent=23 // pred_check
          %p134 = pneg %p35
        $region26: #{tpu_custom_call.1} parent=23 // pred_check_branch
          %136 = sbr.rel (%p134) target = $region28
        $region27: #{tpu_custom_call.1} parent=23 // pred_region
          %s137 = sand.u32 %s25, 1
          %s138 = scalar_lea.sflag [#allocation3], %s137
          %s139 = sand.u32 %s25, 1
          %s140 = smul.addr %s139, 128
          %s141 = scalar_lea.vmem [#allocation2], %s140
          %s143 = ssub.s32 2048, 2048
          %144 = vsyncadd %s138, %s143
          %s145 = smul.addr %s15, 16
          %s146 = smul.addr %s145, 128
          %s147 = scalar_lea.hbm %s0, %s146
          %s148 = sshll.u32 %s141, 4
          %s149 = int_to_ptr.vmem [resolvable:$true] %s148
          %154 = dma.hbm_to_vmem [thread:$0]  %s147, 2048, %s149, %s138, 256, 256, 16
        $region28: #{tpu_custom_call.1} parent=23 // pred_fallthru
          _
      $region24: #{tpu_custom_call.1} parent=5 // pred_fallthru
        _
      %p155 = scmp.le.s32.totalorder 1, %s15
      %p156 = scmp.lt.s32.totalorder %s15, 3
      %p157 = pnand %p155, %p156
      %p158 = pneg %p157
      // Predicated region
      $region29: #{tpu_custom_call.1} parent=5 // pred_check
        _
      $region30: #{tpu_custom_call.1} parent=5 // pred_check_branch
        %160 = sbr.rel (%p157) target = $region32
      $region31: #{tpu_custom_call.1} parent=5 // pred_region
        %s161 = ssub.s32 %s15, 1
        %s162 = sand.u32 %s28, 1
        %s163 = scalar_lea.sflag [#allocation3], %s162
        %s164 = sand.u32 %s28, 1
        %s165 = smul.addr %s164, 128
        %s166 = scalar_lea.vmem [#allocation2], %s165
        // Predicated region
        $region33: #{tpu_custom_call.1} parent=31 // pred_check
          %p167 = pneg %p41
        $region34: #{tpu_custom_call.1} parent=31 // pred_check_branch
          %169 = sbr.rel (%p167) target = $region36
        $region35: #{tpu_custom_call.1} parent=31 // pred_region
          %170 = dma.done %s163, 2048
        $region36: #{tpu_custom_call.1} parent=31 // pred_fallthru
          _
        %s171 = sand.u32 %s28, 1
        %s172 = scalar_lea.sflag [#allocation3], %s171
        %s173 = sand.u32 %s28, 1
        %s174 = smul.addr %s173, 128
        %s175 = scalar_lea.vmem [#allocation2], %s174
        %p176 = pneg %p41
        %p177 = pneg %p38
        %p178 = pneg %p62
        %p179 = pneg %p59
        %p180 = pneg %p83
        %p181 = pneg %p80
        %p182 = pneg %p109
        %p183 = pneg %p106
        %s184 = sand.u32 %s96, 1
        %s185 = scalar_lea.sflag [#allocation4], %s184
        %s186 = sand.u32 %s96, 1
        %s187 = smul.addr %s186, 128
        %s188 = scalar_lea.vmem [#allocation5], %s187
        %v189 = vld [vmem:[%s166] sm:$0xff]
        %v190 = vld [vmem:[%s166 + $0x8] sm:$0xff]
        %v191 = vld [vmem:[%s166 + $0x10] sm:$0xff]
        %v192 = vld [vmem:[%s166 + $0x18] sm:$0xff]
        %v193 = vld [vmem:[%s166 + $0x20] sm:$0xff]
        %v194 = vld [vmem:[%s166 + $0x28] sm:$0xff]
        %v195 = vld [vmem:[%s166 + $0x30] sm:$0xff]
        %v196 = vld [vmem:[%s166 + $0x38] sm:$0xff]
        %v197 = vld [vmem:[%s166 + $0x40] sm:$0xff]
        %v198 = vld [vmem:[%s166 + $0x48] sm:$0xff]
        %v199 = vld [vmem:[%s166 + $0x50] sm:$0xff]
        %v200 = vld [vmem:[%s166 + $0x58] sm:$0xff]
        %v201 = vld [vmem:[%s166 + $0x60] sm:$0xff]
        %v202 = vld [vmem:[%s166 + $0x68] sm:$0xff]
        %v203 = vld [vmem:[%s166 + $0x70] sm:$0xff]
        %v204 = vld [vmem:[%s166 + $0x78] sm:$0xff]
        %v205 = vadd.f32 %v189, %v190
        %206 = vadd.xlane.f32.xlu0 %v205
        %v207 = vpop.xlane.xlu0 %206
        %v208 = vadd.f32 %v191, %v192
        %209 = vadd.xlane.f32.xlu0 %v208
        %v210 = vpop.xlane.xlu0 %209
        %v211 = vadd.f32 %v193, %v194
        %212 = vadd.xlane.f32.xlu0 %v211
        %v213 = vpop.xlane.xlu0 %212
        %v214 = vadd.f32 %v195, %v196
        %215 = vadd.xlane.f32.xlu0 %v214
        %v216 = vpop.xlane.xlu0 %215
        %v217 = vadd.f32 %v197, %v198
        %218 = vadd.xlane.f32.xlu0 %v217
        %v219 = vpop.xlane.xlu0 %218
        %v220 = vadd.f32 %v199, %v200
        %221 = vadd.xlane.f32.xlu0 %v220
        %v222 = vpop.xlane.xlu0 %221
        %v223 = vadd.f32 %v201, %v202
        %224 = vadd.xlane.f32.xlu0 %v223
        %v225 = vpop.xlane.xlu0 %224
        %v226 = vadd.f32 %v203, %v204
        %227 = vadd.xlane.f32.xlu0 %v226
        %v228 = vpop.xlane.xlu0 %227
        %v229 = vmul.f32 %v207, 0.00390625
        %v230 = vmul.f32 %v210, 0.00390625
        %v231 = vmul.f32 %v213, 0.00390625
        %v232 = vmul.f32 %v216, 0.00390625
        %v233 = vmul.f32 %v219, 0.00390625
        %v234 = vmul.f32 %v222, 0.00390625
        %v235 = vmul.f32 %v225, 0.00390625
        %v236 = vmul.f32 %v228, 0.00390625
        %v237 = vmax.f32 %v189, %v190
        %238 = vmax.xlane.f32.xlu0 %v237
        %v239 = vpop.xlane.xlu0 %238
        %v240 = vmax.f32 %v191, %v192
        %241 = vmax.xlane.f32.xlu0 %v240
        %v242 = vpop.xlane.xlu0 %241
        %v243 = vmax.f32 %v193, %v194
        %244 = vmax.xlane.f32.xlu0 %v243
        %v245 = vpop.xlane.xlu0 %244
        %v246 = vmax.f32 %v195, %v196
        %247 = vmax.xlane.f32.xlu0 %v246
        %v248 = vpop.xlane.xlu0 %247
        %v249 = vmax.f32 %v197, %v198
        %250 = vmax.xlane.f32.xlu0 %v249
        %v251 = vpop.xlane.xlu0 %250
        %v252 = vmax.f32 %v199, %v200
        %253 = vmax.xlane.f32.xlu0 %v252
        %v254 = vpop.xlane.xlu0 %253
        %v255 = vmax.f32 %v201, %v202
        %256 = vmax.xlane.f32.xlu0 %v255
        %v257 = vpop.xlane.xlu0 %256
        %v258 = vmax.f32 %v203, %v204
        %259 = vmax.xlane.f32.xlu0 %v258
        %v260 = vpop.xlane.xlu0 %259
        %v261 = vld [vmem:[%s1] sm:$0xf]
        %v262 = vld [vmem:[%s2] sm:$0xff]
        %v263 = vld [vmem:[%s2 + $0x8] sm:$0xff]
        %v264 = vld [vmem:[%s2 + $0x10] sm:$0xff]
        %v265 = vld [vmem:[%s2 + $0x18] sm:$0xff]
        %v266 = vld [vmem:[%s2 + $0x20] sm:$0xff]
        %v267 = vld [vmem:[%s2 + $0x28] sm:$0xff]
        %v268 = vld [vmem:[%s2 + $0x30] sm:$0xff]
        %v269 = vld [vmem:[%s2 + $0x38] sm:$0xff]
        %v278 = vlaneseq
        %v279 = vand.u32 %v278, 127
        %v280 = vlaneseq
        %v281 = vshrl.u32 %v280, 7
        %v282 = vsub.s32 %v279, %v281
        %v283 = vrot.slane %v229, %v282
        %v284 = vadd.s32 %v279, 4294967288
        %v285 = vlaneseq
        %v286 = vshrl.u32 %v285, 7
        %v287 = vsub.s32 %v284, %v286
        %v288 = vrot.slane %v230, %v287
        %vm289 = vcmask 130112
        %v290 = vsel %vm289, %v288, %v283
        %v291 = vadd.s32 %v279, 4294967280
        %v292 = vlaneseq
        %v293 = vshrl.u32 %v292, 7
        %v294 = vsub.s32 %v291, %v293
        %v295 = vrot.slane %v231, %v294
        %vm296 = vcmask 195712
        %v297 = vsel %vm296, %v295, %v290
        %v298 = vadd.s32 %v279, 4294967272
        %v299 = vlaneseq
        %v300 = vshrl.u32 %v299, 7
        %v301 = vsub.s32 %v298, %v300
        %v302 = vrot.slane %v232, %v301
        %vm303 = vcmask 261312
        %v304 = vsel %vm303, %v302, %v297
        %v305 = vadd.s32 %v279, 4294967264
        %v306 = vlaneseq
        %v307 = vshrl.u32 %v306, 7
        %v308 = vsub.s32 %v305, %v307
        %v309 = vrot.slane %v233, %v308
        %vm310 = vcmask 326912
        %v311 = vsel %vm310, %v309, %v304
        %v312 = vadd.s32 %v279, 4294967256
        %v313 = vlaneseq
        %v314 = vshrl.u32 %v313, 7
        %v315 = vsub.s32 %v312, %v314
        %v316 = vrot.slane %v234, %v315
        %vm317 = vcmask 392512
        %v318 = vsel %vm317, %v316, %v311
        %v319 = vadd.s32 %v279, 4294967248
        %v320 = vlaneseq
        %v321 = vshrl.u32 %v320, 7
        %v322 = vsub.s32 %v319, %v321
        %v323 = vrot.slane %v235, %v322
        %vm324 = vcmask 458112
        %v325 = vsel %vm324, %v323, %v318
        %v326 = vadd.s32 %v279, 4294967240
        %v327 = vlaneseq
        %v328 = vshrl.u32 %v327, 7
        %v329 = vsub.s32 %v326, %v328
        %v330 = vrot.slane %v236, %v329
        %vm331 = vcmask 523712
        %v332 = vsel %vm331, %v330, %v325
        %vm333 = vcmask 523264
        %v334 = vsel %vm333, %v332, 0
        %v337 = vsel %vm333, %v261, 0
        %339 = vmatprep.subr.mxu0 0.0
        %340 = vmatpush1.xpose.msra.mxu0 0.0
        %341 = vmatprep.subr.mxu0 0.0
        %342 = vmatpush1.xpose.msra.mxu0 0.0
        %343 = vmatprep.subr.mxu0 0.0
        %344 = vmatpush1.xpose.msra.mxu0 0.0
        %345 = vmatprep.subr.mxu0 0.0
        %346 = vmatpush1.xpose.msra.mxu0 0.0
        %347 = vmatprep.subr.mxu0 0.0
        %348 = vmatpush1.xpose.msra.mxu0 0.0
        %349 = vmatprep.subr.mxu0 0.0
        %350 = vmatpush1.xpose.msra.mxu0 0.0
        %351 = vmatprep.subr.mxu0 0.0
        %352 = vmatpush1.xpose.msra.mxu0 0.0
        %353 = vmatprep.subr.mxu0 0.0
        %354 = vmatpush1.xpose.msra.mxu0 0.0
        %355 = vmatprep.subr.mxu0 0.0
        %356 = vmatpush1.xpose.msra.mxu0 0.0
        %357 = vmatprep.subr.mxu0 0.0
        %358 = vmatpush1.xpose.msra.mxu0 0.0
        %359 = vmatprep.subr.mxu0 0.0
        %360 = vmatpush1.xpose.msra.mxu0 0.0
        %361 = vmatprep.subr.mxu0 0.0
        %362 = vmatpush1.xpose.msra.mxu0 0.0
        %363 = vmatprep.subr.mxu0 0.0
        %364 = vmatpush1.xpose.msra.mxu0 0.0
        %365 = vmatprep.subr.mxu0 0.0
        %366 = vmatpush1.xpose.msra.mxu0 0.0
        %367 = vmatprep.subr.mxu0 0.0
        %368 = vmatpush1.xpose.msra.mxu0 0.0
        %369 = vmatprep.subr.mxu0 0.0
        %370 = vmatpush1.xpose.msra.mxu0 %v337
        %371 = vmatprep.subr.mxu0 0.0
        %372 = vmatpush2.xpose.msra.mxu0 0.0
        %373 = vmatprep.subr.mxu0 0.0
        %374 = vmatpush2.xpose.msra.mxu0 0.0
        %375 = vmatprep.subr.mxu0 0.0
        %376 = vmatpush2.xpose.msra.mxu0 0.0
        %377 = vmatprep.subr.mxu0 0.0
        %378 = vmatpush2.xpose.msra.mxu0 0.0
        %379 = vmatprep.subr.mxu0 0.0
        %380 = vmatpush2.xpose.msra.mxu0 0.0
        %381 = vmatprep.subr.mxu0 0.0
        %382 = vmatpush2.xpose.msra.mxu0 0.0
        %383 = vmatprep.subr.mxu0 0.0
        %384 = vmatpush2.xpose.msra.mxu0 0.0
        %385 = vmatprep.subr.mxu0 0.0
        %386 = vmatpush2.xpose.msra.mxu0 0.0
        %387 = vmatprep.subr.mxu0 0.0
        %388 = vmatpush2.xpose.msra.mxu0 0.0
        %389 = vmatprep.subr.mxu0 0.0
        %390 = vmatpush2.xpose.msra.mxu0 0.0
        %391 = vmatprep.subr.mxu0 0.0
        %392 = vmatpush2.xpose.msra.mxu0 0.0
        %393 = vmatprep.subr.mxu0 0.0
        %394 = vmatpush2.xpose.msra.mxu0 0.0
        %395 = vmatprep.subr.mxu0 0.0
        %396 = vmatpush2.xpose.msra.mxu0 0.0
        %397 = vmatprep.subr.mxu0 0.0
        %398 = vmatpush2.xpose.msra.mxu0 0.0
        %399 = vmatprep.subr.mxu0 0.0
        %400 = vmatpush2.xpose.msra.mxu0 0.0
        %401 = vmatprep.subr.mxu0 0.0
        %402 = vmatpush2.xpose.msra.mxu0 0.0
        %403 = vmatprep.mubr.f32.mxu0 0.0
        %404 = vmatmul.mubr.f32.gmra.mxu0 %v334
        %v405 = vpop.f32.mrf.mxu0
        %v406 = vadd.f32 0.0, %v405
        %v407 = vpop.f32.mrf.mxu0
        %408 = vdwg.mxu0
        %v409 = vmax.f32 %v406, 0.0
        %v418 = vlaneseq
        %v419 = vshrl.u32 %v418, 7
        %v420 = vsub.s32 %v279, %v419
        %v421 = vrot.slane %v239, %v420
        %v422 = vlaneseq
        %v423 = vshrl.u32 %v422, 7
        %v424 = vsub.s32 %v284, %v423
        %v425 = vrot.slane %v242, %v424
        %v426 = vsel %vm289, %v425, %v421
        %v427 = vlaneseq
        %v428 = vshrl.u32 %v427, 7
        %v429 = vsub.s32 %v291, %v428
        %v430 = vrot.slane %v245, %v429
        %v431 = vsel %vm296, %v430, %v426
        %v432 = vlaneseq
        %v433 = vshrl.u32 %v432, 7
        %v434 = vsub.s32 %v298, %v433
        %v435 = vrot.slane %v248, %v434
        %v436 = vsel %vm303, %v435, %v431
        %v437 = vlaneseq
        %v438 = vshrl.u32 %v437, 7
        %v439 = vsub.s32 %v305, %v438
        %v440 = vrot.slane %v251, %v439
        %v441 = vsel %vm310, %v440, %v436
        %v442 = vlaneseq
        %v443 = vshrl.u32 %v442, 7
        %v444 = vsub.s32 %v312, %v443
        %v445 = vrot.slane %v254, %v444
        %v446 = vsel %vm317, %v445, %v441
        %v447 = vlaneseq
        %v448 = vshrl.u32 %v447, 7
        %v449 = vsub.s32 %v319, %v448
        %v450 = vrot.slane %v257, %v449
        %v451 = vsel %vm324, %v450, %v446
        %v452 = vlaneseq
        %v453 = vshrl.u32 %v452, 7
        %v454 = vsub.s32 %v326, %v453
        %v455 = vrot.slane %v260, %v454
        %v456 = vsel %vm331, %v455, %v451
        %v457 = vsel %vm333, %v456, 0
        %459 = vmatprep.subr.mxu0 0.0
        %460 = vmatpush1.xpose.msra.mxu0 0.0
        %461 = vmatprep.subr.mxu0 0.0
        %462 = vmatpush1.xpose.msra.mxu0 0.0
        %463 = vmatprep.subr.mxu0 0.0
        %464 = vmatpush1.xpose.msra.mxu0 0.0
        %465 = vmatprep.subr.mxu0 0.0
        %466 = vmatpush1.xpose.msra.mxu0 0.0
        %467 = vmatprep.subr.mxu0 0.0
        %468 = vmatpush1.xpose.msra.mxu0 0.0
        %469 = vmatprep.subr.mxu0 0.0
        %470 = vmatpush1.xpose.msra.mxu0 0.0
        %471 = vmatprep.subr.mxu0 0.0
        %472 = vmatpush1.xpose.msra.mxu0 0.0
        %473 = vmatprep.subr.mxu0 0.0
        %474 = vmatpush1.xpose.msra.mxu0 0.0
        %475 = vmatprep.subr.mxu0 0.0
        %476 = vmatpush1.xpose.msra.mxu0 0.0
        %477 = vmatprep.subr.mxu0 0.0
        %478 = vmatpush1.xpose.msra.mxu0 0.0
        %479 = vmatprep.subr.mxu0 0.0
        %480 = vmatpush1.xpose.msra.mxu0 0.0
        %481 = vmatprep.subr.mxu0 0.0
        %482 = vmatpush1.xpose.msra.mxu0 0.0
        %483 = vmatprep.subr.mxu0 0.0
        %484 = vmatpush1.xpose.msra.mxu0 0.0
        %485 = vmatprep.subr.mxu0 0.0
        %486 = vmatpush1.xpose.msra.mxu0 0.0
        %487 = vmatprep.subr.mxu0 0.0
        %488 = vmatpush1.xpose.msra.mxu0 0.0
        %489 = vmatprep.subr.mxu0 0.0
        %490 = vmatpush1.xpose.msra.mxu0 %v337
        %491 = vmatprep.subr.mxu0 0.0
        %492 = vmatpush2.xpose.msra.mxu0 0.0
        %493 = vmatprep.subr.mxu0 0.0
        %494 = vmatpush2.xpose.msra.mxu0 0.0
        %495 = vmatprep.subr.mxu0 0.0
        %496 = vmatpush2.xpose.msra.mxu0 0.0
        %497 = vmatprep.subr.mxu0 0.0
        %498 = vmatpush2.xpose.msra.mxu0 0.0
        %499 = vmatprep.subr.mxu0 0.0
        %500 = vmatpush2.xpose.msra.mxu0 0.0
        %501 = vmatprep.subr.mxu0 0.0
        %502 = vmatpush2.xpose.msra.mxu0 0.0
        %503 = vmatprep.subr.mxu0 0.0
        %504 = vmatpush2.xpose.msra.mxu0 0.0
        %505 = vmatprep.subr.mxu0 0.0
        %506 = vmatpush2.xpose.msra.mxu0 0.0
        %507 = vmatprep.subr.mxu0 0.0
        %508 = vmatpush2.xpose.msra.mxu0 0.0
        %509 = vmatprep.subr.mxu0 0.0
        %510 = vmatpush2.xpose.msra.mxu0 0.0
        %511 = vmatprep.subr.mxu0 0.0
        %512 = vmatpush2.xpose.msra.mxu0 0.0
        %513 = vmatprep.subr.mxu0 0.0
        %514 = vmatpush2.xpose.msra.mxu0 0.0
        %515 = vmatprep.subr.mxu0 0.0
        %516 = vmatpush2.xpose.msra.mxu0 0.0
        %517 = vmatprep.subr.mxu0 0.0
        %518 = vmatpush2.xpose.msra.mxu0 0.0
        %519 = vmatprep.subr.mxu0 0.0
        %520 = vmatpush2.xpose.msra.mxu0 0.0
        %521 = vmatprep.subr.mxu0 0.0
        %522 = vmatpush2.xpose.msra.mxu0 0.0
        %523 = vmatprep.mubr.f32.mxu0 0.0
        %524 = vmatmul.mubr.f32.gmra.mxu0 %v457
        %v525 = vpop.f32.mrf.mxu0
        %v526 = vadd.f32 0.0, %v525
        %v527 = vpop.f32.mrf.mxu0
        %528 = vdwg.mxu0
        %v529 = vmax.f32 %v526, 0.0
        %vm530 = vcmask 31744
        %v532 = vsel %vm530, %v529, 0
        %v535 = vsel %vm530, %v262, 0
        %v538 = vsel %vm530, %v263, 0
        %v541 = vsel %vm530, %v264, 0
        %v544 = vsel %vm530, %v265, 0
        %v547 = vsel %vm530, %v266, 0
        %v550 = vsel %vm530, %v267, 0
        %v553 = vsel %vm530, %v268, 0
        %v556 = vsel %vm530, %v269, 0
        %558 = vmatprep.subr.mxu0 0.0
        %559 = vmatpush1.xpose.msra.mxu0 0.0
        %560 = vmatprep.subr.mxu0 0.0
        %561 = vmatpush1.xpose.msra.mxu0 0.0
        %562 = vmatprep.subr.mxu0 0.0
        %563 = vmatpush1.xpose.msra.mxu0 0.0
        %564 = vmatprep.subr.mxu0 0.0
        %565 = vmatpush1.xpose.msra.mxu0 0.0
        %566 = vmatprep.subr.mxu0 0.0
        %567 = vmatpush1.xpose.msra.mxu0 0.0
        %568 = vmatprep.subr.mxu0 0.0
        %569 = vmatpush1.xpose.msra.mxu0 0.0
        %570 = vmatprep.subr.mxu0 0.0
        %571 = vmatpush1.xpose.msra.mxu0 0.0
        %572 = vmatprep.subr.mxu0 0.0
        %573 = vmatpush1.xpose.msra.mxu0 0.0
        %574 = vmatprep.subr.mxu0 0.0
        %575 = vmatpush1.xpose.msra.mxu0 %v556
        %576 = vmatprep.subr.mxu0 0.0
        %577 = vmatpush1.xpose.msra.mxu0 %v553
        %578 = vmatprep.subr.mxu0 0.0
        %579 = vmatpush1.xpose.msra.mxu0 %v550
        %580 = vmatprep.subr.mxu0 0.0
        %581 = vmatpush1.xpose.msra.mxu0 %v547
        %582 = vmatprep.subr.mxu0 0.0
        %583 = vmatpush1.xpose.msra.mxu0 %v544
        %584 = vmatprep.subr.mxu0 0.0
        %585 = vmatpush1.xpose.msra.mxu0 %v541
        %586 = vmatprep.subr.mxu0 0.0
        %587 = vmatpush1.xpose.msra.mxu0 %v538
        %588 = vmatprep.subr.mxu0 0.0
        %589 = vmatpush1.xpose.msra.mxu0 %v535
        %590 = vmatprep.subr.mxu0 0.0
        %591 = vmatpush2.xpose.msra.mxu0 0.0
        %592 = vmatprep.subr.mxu0 0.0
        %593 = vmatpush2.xpose.msra.mxu0 0.0
        %594 = vmatprep.subr.mxu0 0.0
        %595 = vmatpush2.xpose.msra.mxu0 0.0
        %596 = vmatprep.subr.mxu0 0.0
        %597 = vmatpush2.xpose.msra.mxu0 0.0
        %598 = vmatprep.subr.mxu0 0.0
        %599 = vmatpush2.xpose.msra.mxu0 0.0
        %600 = vmatprep.subr.mxu0 0.0
        %601 = vmatpush2.xpose.msra.mxu0 0.0
        %602 = vmatprep.subr.mxu0 0.0
        %603 = vmatpush2.xpose.msra.mxu0 0.0
        %604 = vmatprep.subr.mxu0 0.0
        %605 = vmatpush2.xpose.msra.mxu0 0.0
        %606 = vmatprep.subr.mxu0 0.0
        %607 = vmatpush2.xpose.msra.mxu0 0.0
        %608 = vmatprep.subr.mxu0 0.0
        %609 = vmatpush2.xpose.msra.mxu0 0.0
        %610 = vmatprep.subr.mxu0 0.0
        %611 = vmatpush2.xpose.msra.mxu0 0.0
        %612 = vmatprep.subr.mxu0 0.0
        %613 = vmatpush2.xpose.msra.mxu0 0.0
        %614 = vmatprep.subr.mxu0 0.0
        %615 = vmatpush2.xpose.msra.mxu0 0.0
        %616 = vmatprep.subr.mxu0 0.0
        %617 = vmatpush2.xpose.msra.mxu0 0.0
        %618 = vmatprep.subr.mxu0 0.0
        %619 = vmatpush2.xpose.msra.mxu0 0.0
        %620 = vmatprep.subr.mxu0 0.0
        %621 = vmatpush2.xpose.msra.mxu0 0.0
        %622 = vmatprep.mubr.f32.mxu0 0.0
        %623 = vmatmul.mubr.f32.gmra.mxu0 %v532
        %v624 = vpop.f32.mrf.mxu0
        %v625 = vadd.f32 0.0, %v624
        %v626 = vpop.f32.mrf.mxu0
        %627 = vdwg.mxu0
        %v629 = vsel %vm530, %v409, 0
        %631 = vmatprep.subr.mxu0 0.0
        %632 = vmatpush1.xpose.msra.mxu0 0.0
        %633 = vmatprep.subr.mxu0 0.0
        %634 = vmatpush1.xpose.msra.mxu0 0.0
        %635 = vmatprep.subr.mxu0 0.0
        %636 = vmatpush1.xpose.msra.mxu0 0.0
        %637 = vmatprep.subr.mxu0 0.0
        %638 = vmatpush1.xpose.msra.mxu0 0.0
        %639 = vmatprep.subr.mxu0 0.0
        %640 = vmatpush1.xpose.msra.mxu0 0.0
        %641 = vmatprep.subr.mxu0 0.0
        %642 = vmatpush1.xpose.msra.mxu0 0.0
        %643 = vmatprep.subr.mxu0 0.0
        %644 = vmatpush1.xpose.msra.mxu0 0.0
        %645 = vmatprep.subr.mxu0 0.0
        %646 = vmatpush1.xpose.msra.mxu0 0.0
        %647 = vmatprep.subr.mxu0 0.0
        %648 = vmatpush1.xpose.msra.mxu0 %v556
        %649 = vmatprep.subr.mxu0 0.0
        %650 = vmatpush1.xpose.msra.mxu0 %v553
        %651 = vmatprep.subr.mxu0 0.0
        %652 = vmatpush1.xpose.msra.mxu0 %v550
        %653 = vmatprep.subr.mxu0 0.0
        %654 = vmatpush1.xpose.msra.mxu0 %v547
        %655 = vmatprep.subr.mxu0 0.0
        %656 = vmatpush1.xpose.msra.mxu0 %v544
        %657 = vmatprep.subr.mxu0 0.0
        %658 = vmatpush1.xpose.msra.mxu0 %v541
        %659 = vmatprep.subr.mxu0 0.0
        %660 = vmatpush1.xpose.msra.mxu0 %v538
        %661 = vmatprep.subr.mxu0 0.0
        %662 = vmatpush1.xpose.msra.mxu0 %v535
        %663 = vmatprep.subr.mxu0 0.0
        %664 = vmatpush2.xpose.msra.mxu0 0.0
        %665 = vmatprep.subr.mxu0 0.0
        %666 = vmatpush2.xpose.msra.mxu0 0.0
        %667 = vmatprep.subr.mxu0 0.0
        %668 = vmatpush2.xpose.msra.mxu0 0.0
        %669 = vmatprep.subr.mxu0 0.0
        %670 = vmatpush2.xpose.msra.mxu0 0.0
        %671 = vmatprep.subr.mxu0 0.0
        %672 = vmatpush2.xpose.msra.mxu0 0.0
        %673 = vmatprep.subr.mxu0 0.0
        %674 = vmatpush2.xpose.msra.mxu0 0.0
        %675 = vmatprep.subr.mxu0 0.0
        %676 = vmatpush2.xpose.msra.mxu0 0.0
        %677 = vmatprep.subr.mxu0 0.0
        %678 = vmatpush2.xpose.msra.mxu0 0.0
        %679 = vmatprep.subr.mxu0 0.0
        %680 = vmatpush2.xpose.msra.mxu0 0.0
        %681 = vmatprep.subr.mxu0 0.0
        %682 = vmatpush2.xpose.msra.mxu0 0.0
        %683 = vmatprep.subr.mxu0 0.0
        %684 = vmatpush2.xpose.msra.mxu0 0.0
        %685 = vmatprep.subr.mxu0 0.0
        %686 = vmatpush2.xpose.msra.mxu0 0.0
        %687 = vmatprep.subr.mxu0 0.0
        %688 = vmatpush2.xpose.msra.mxu0 0.0
        %689 = vmatprep.subr.mxu0 0.0
        %690 = vmatpush2.xpose.msra.mxu0 0.0
        %691 = vmatprep.subr.mxu0 0.0
        %692 = vmatpush2.xpose.msra.mxu0 0.0
        %693 = vmatprep.subr.mxu0 0.0
        %694 = vmatpush2.xpose.msra.mxu0 0.0
        %695 = vmatprep.mubr.f32.mxu0 0.0
        %696 = vmatmul.mubr.f32.gmra.mxu0 %v629
        %v697 = vpop.f32.mrf.mxu0
        %v698 = vadd.f32 %v625, %v697
        %v699 = vpop.f32.mrf.mxu0
        %700 = vdwg.mxu0
        %v701 = vxor.u32 %v698, 2147483648
        %v702 = vmul.f32 %v701, 1.442695
        %v703 = vpow.pop %v702
        %v704 = vadd.f32 %v703, 1.0
        %v705 = vrcp.pop %v704
        %v706 = vmul.f32 1.0, %v705
        %v707 = vlaneseq
        %v708 = vshrl.u32 %v707, 7
        %v709 = vsub.s32 0, %v708
        %v710 = vrot.slane %v706, %v709
        %712 = vbcast.lane.b32.xlu0 %v710, 256
        %v713 = vpop.permute.xlu0 %712
        %s715 = sor.u32 256, 8
        %716 = vbcast.lane.b32.xlu0 %v710, %s715
        %v717 = vpop.permute.xlu0 %716
        %s719 = sor.u32 256, 16
        %720 = vbcast.lane.b32.xlu0 %v710, %s719
        %v721 = vpop.permute.xlu0 %720
        %s723 = sor.u32 256, 24
        %724 = vbcast.lane.b32.xlu0 %v710, %s723
        %v725 = vpop.permute.xlu0 %724
        %s727 = sor.u32 256, 32
        %728 = vbcast.lane.b32.xlu0 %v710, %s727
        %v729 = vpop.permute.xlu0 %728
        %s731 = sor.u32 256, 40
        %732 = vbcast.lane.b32.xlu0 %v710, %s731
        %v733 = vpop.permute.xlu0 %732
        %s735 = sor.u32 256, 48
        %736 = vbcast.lane.b32.xlu0 %v710, %s735
        %v737 = vpop.permute.xlu0 %736
        %s739 = sor.u32 256, 56
        %740 = vbcast.lane.b32.xlu0 %v710, %s739
        %v741 = vpop.permute.xlu0 %740
        %v742 = vmul.f32 %v189, %v713
        %v743 = vmul.f32 %v190, %v713
        %v744 = vmul.f32 %v191, %v717
        %v745 = vmul.f32 %v192, %v717
        %v746 = vmul.f32 %v193, %v721
        %v747 = vmul.f32 %v194, %v721
        %v748 = vmul.f32 %v195, %v725
        %v749 = vmul.f32 %v196, %v725
        %v750 = vmul.f32 %v197, %v729
        %v751 = vmul.f32 %v198, %v729
        %v752 = vmul.f32 %v199, %v733
        %v753 = vmul.f32 %v200, %v733
        %v754 = vmul.f32 %v201, %v737
        %v755 = vmul.f32 %v202, %v737
        %v756 = vmul.f32 %v203, %v741
        %v757 = vmul.f32 %v204, %v741
        %758 = vst [vmem:[%s188] sm:$0xff] %v742
        %759 = vst [vmem:[%s188 + $0x8] sm:$0xff] %v743
        %760 = vst [vmem:[%s188 + $0x10] sm:$0xff] %v744
        %761 = vst [vmem:[%s188 + $0x18] sm:$0xff] %v745
        %762 = vst [vmem:[%s188 + $0x20] sm:$0xff] %v746
        %763 = vst [vmem:[%s188 + $0x28] sm:$0xff] %v747
        %764 = vst [vmem:[%s188 + $0x30] sm:$0xff] %v748
        %765 = vst [vmem:[%s188 + $0x38] sm:$0xff] %v749
        %766 = vst [vmem:[%s188 + $0x40] sm:$0xff] %v750
        %767 = vst [vmem:[%s188 + $0x48] sm:$0xff] %v751
        %768 = vst [vmem:[%s188 + $0x50] sm:$0xff] %v752
        %769 = vst [vmem:[%s188 + $0x58] sm:$0xff] %v753
        %770 = vst [vmem:[%s188 + $0x60] sm:$0xff] %v754
        %771 = vst [vmem:[%s188 + $0x68] sm:$0xff] %v755
        %772 = vst [vmem:[%s188 + $0x70] sm:$0xff] %v756
        %773 = vst [vmem:[%s188 + $0x78] sm:$0xff] %v757
        %s774 = sand.u32 %s96, 1
        %s775 = scalar_lea.sflag [#allocation4], %s774
        %s776 = sand.u32 %s96, 1
        %s777 = smul.addr %s776, 128
        %s778 = scalar_lea.vmem [#allocation5], %s777
        // Predicated region
        $region37: #{tpu_custom_call.1} parent=31 // pred_check
          %p779 = pneg %p106
        $region38: #{tpu_custom_call.1} parent=31 // pred_check_branch
          %781 = sbr.rel (%p779) target = $region40
        $region39: #{tpu_custom_call.1} parent=31 // pred_region
          %s783 = ssub.s32 2048, 2048
          %784 = vsyncadd %s775, %s783
          %s785 = smul.addr %s20, 16
          %s786 = smul.addr %s785, 128
          %s787 = scalar_lea.hbm %s3, %s786
          %s788 = sshll.u32 %s778, 4
          %s789 = int_to_ptr.vmem [resolvable:$true] %s788
          %794 = dma.vmem_to_hbm [thread:$0]  %s789, 2048, %s787, %s775, 256, 256, 16
        $region40: #{tpu_custom_call.1} parent=31 // pred_fallthru
          _
      $region32: #{tpu_custom_call.1} parent=5 // pred_fallthru
        _
      %p795 = scmp.le.s32.totalorder 2, %s15
      // Predicated region
      $region41: #{tpu_custom_call.1} parent=5 // pred_check
        %p796 = pneg %p795
      $region42: #{tpu_custom_call.1} parent=5 // pred_check_branch
        %798 = sbr.rel (%p796) target = $region44
      $region43: #{tpu_custom_call.1} parent=5 // pred_region
        %s799 = ssub.s32 %s15, 2
        // Predicated region
        $region45: #{tpu_custom_call.1} parent=43 // pred_check
          %p800 = pneg %p112
        $region46: #{tpu_custom_call.1} parent=43 // pred_check_branch
          %802 = sbr.rel (%p800) target = $region48
        $region47: #{tpu_custom_call.1} parent=43 // pred_region
          %s803 = sand.u32 %s97, 1
          %s804 = scalar_lea.sflag [#allocation4], %s803
          %s805 = sand.u32 %s97, 1
          %s806 = smul.addr %s805, 128
          %s807 = scalar_lea.vmem [#allocation5], %s806
          %808 = dma.done %s804, 2048
        $region48: #{tpu_custom_call.1} parent=43 // pred_fallthru
          _
      $region44: #{tpu_custom_call.1} parent=5 // pred_fallthru
        _
    $region6: #{tpu_custom_call.1} parent=1 // loop_footer
      %s19 = sadd.s32 1, %s15
    $region7: #{tpu_custom_call.1} parent=1 // loop_footer_branch
      %14 = sbr.rel target = $region3
    $region8: #{tpu_custom_call.1} parent=1 // loop_exit
      _
    %809 = vsyncpa [#allocation3], 1
    %s810 = scalar_lea.sflag [#allocation3], 1
    %811 = vsyncpa %s810, 1
    %812 = vsyncpa [#allocation4], 1
    %s813 = scalar_lea.sflag [#allocation4], 1
    %814 = vsyncpa %s813, 1

</llo_original>
